<compile_context>
chip_gen: v6e
topology: v6e:2x2x1
jax: 0.10.0
libtpu: 0.0.40
codegen_flags: <defaults>
</compile_context>

<pallas_src>
import functools

import numpy as np
import jax
import jax.numpy as jnp
from jax.experimental import pallas as pl
from jax.experimental.pallas import tpu as pltpu


def _collapse_mats(mats, d_in):
    """Collapse the metapath relation chain into a single (D_in, D_out) f32 matrix."""
    if not mats:
        return jnp.eye(d_in, dtype=jnp.float32)
    m_full = mats[0].astype(jnp.float32)
    for m in mats[1:]:
        m_full = jnp.dot(m_full, m.astype(jnp.float32),
                         preferred_element_type=jnp.float32,
                         precision=jax.lax.Precision.HIGHEST)
    return m_full


def _pick_tile(n, cap):
    """Largest multiple of 128 that divides n and is <= cap (n must be a multiple of 128)."""
    assert n % 128 == 0, "tile picker requires a multiple of 128"
    t = max(128, (min(cap, n) // 128) * 128)
    while n % t != 0:
        t -= 128
    return t


def _decoder_kernel(e1_ref, m_ref, e2_ref, out_ref, acc_ref, *, ti, e1_resident):
    # grid = (j: D_out lane tiles [parallel], i: batch-row tiles [arbitrary / reduction])
    i = pl.program_id(1)

    @pl.when(i == 0)
    def _():
        acc_ref[...] = jnp.zeros_like(acc_ref)

    if e1_resident:
        # embeds1 lives fully in VMEM (constant block index); slice the TI batch columns.
        start = pl.multiple_of(i * ti, 128)
        e1_blk = e1_ref[:, pl.ds(start, ti)]          # (D_in, TI)
    else:
        e1_blk = e1_ref[...]                          # (D_in, TI)

    # C[d, j] = sum_{b in batch tile i} embeds1[d, b] * embeds2[b, j]
    # MXU matmul in natural (M,K)x(K,N) form; f32 accumulation.
    c = jnp.dot(e1_blk, e2_ref[...], preferred_element_type=jnp.float32)   # (D_in, TJ) f32

    # dots[j] += sum_d M[d, j] * C[d, j]   == sum_{b in tile} act[b, j] * embeds2[b, j]
    # Small D_in x TJ elementwise multiply + sublane reduce, all in f32 (v5e-friendly).
    acc_ref[...] += jnp.sum(m_ref[...].astype(jnp.float32) * c, axis=0, keepdims=True)

    @pl.when(i == pl.num_programs(1) - 1)
    def _():
        out_ref[...] = acc_ref[...].astype(out_ref.dtype)


def dot_bilinear_metapath_decode(embeds1, embeds2, mats, *,
                                 lane_tile=2048, row_tile=2048,
                                 storage_dtype=jnp.bfloat16,
                                 e2_buffers=2,
                                 e1_resident_bytes=4 * 1024 * 1024,
                                 vmem_budget_bytes=24 * 1024 * 1024,
                                 min_pallas_bytes=4 * 1024 * 1024,
                                 force_pallas=False):
    """embeds1: (D_in, B), embeds2: (D_out, B), mats: list of (D_k, D_{k+1}).

    Returns dots of shape (B,), i.e. torch.sum((embeds1.t() @ mats[0] @ ...) * embeds2, dim=0).
    """
    d_in, batch = embeds1.shape
    d_out, batch2 = embeds2.shape
    if batch2 != batch:
        raise ValueError("embeds1 / embeds2 batch mismatch")
    if d_out != batch:
        # Same constraint the literal PyTorch broadcast (B, D_out) * (D_out, B) imposes.
        raise ValueError("literal `act * embeds2` requires B == D_out")

    m_full = _collapse_mats(mats, d_in)               # (D_in, D_out), tiny O(sum D^3)
    if m_full.shape != (d_in, d_out):
        raise ValueError("relation-matrix chain does not map D_in -> D_out")

    itemsize = jnp.dtype(storage_dtype).itemsize
    misaligned = (batch % 128 != 0) or (d_out % 128 != 0)
    too_small = batch * d_out * itemsize < min_pallas_bytes
    if misaligned or (too_small and not force_pallas):
        # Fused XLA path: for tiny/awkward shapes kernel dispatch + per-step overhead wins.
        act = jax.lax.dot_general(embeds1.astype(jnp.float32), m_full,
                                  (((0,), (0,)), ((), ())),
                                  preferred_element_type=jnp.float32)
        return jnp.sum(act * embeds2.astype(jnp.float32), axis=0)

    # Store the big operands in the (narrow) storage dtype in HBM; accumulate in f32.
    e1_s = embeds1.astype(storage_dtype)
    e2_s = embeds2.astype(storage_dtype)
    m_s = m_full.astype(storage_dtype)
    # TODO(synk): optional fp8 (e4m3) storage for embeds1/embeds2 on v7x, accuracy-gated.

    # Tile selection: keep >= 2 lane (j) tiles when possible so the "parallel" axis spans
    # both v7x TensorCores; then shrink tiles until the double-buffered footprint fits.
    tj_cap = lane_tile if d_out < 256 else min(lane_tile, max(128, d_out // 2))
    tj = _pick_tile(d_out, tj_cap)
    ti = _pick_tile(batch, row_tile)

    e1_resident = d_in * batch * itemsize <= e1_resident_bytes

    def _footprint(ti_, tj_):
        e1_b = (2 * d_in * batch * itemsize) if e1_resident else (2 * d_in * ti_ * itemsize)
        e2_b = e2_buffers * ti_ * tj_ * itemsize      # dominant stream
        m_b = 2 * d_in * tj_ * itemsize
        c_b = d_in * tj_ * 4                          # in-kernel f32 intermediate
        acc_b = tj_ * 4
        return e1_b + e2_b + m_b + c_b + acc_b

    while _footprint(ti, tj) > vmem_budget_bytes and (ti > 128 or tj > 128):
        if ti >= tj and ti > 128:
            ti = _pick_tile(batch, max(128, ti // 2))
        elif tj > 128:
            tj = _pick_tile(d_out, max(128, tj // 2))
        else:
            break

    grid = (d_out // tj, batch // ti)                 # reduction axis (i) innermost

    if e1_resident:
        e1_spec = pl.BlockSpec((d_in, batch), lambda j, i: (0, 0))    # DMA'd once, stays put
    else:
        e1_spec = pl.BlockSpec((d_in, ti), lambda j, i: (0, i))

    e2_spec_kwargs = {}
    if e2_buffers != 2:
        e2_spec_kwargs["pipeline_mode"] = pl.Buffered(e2_buffers)
    e2_spec = pl.BlockSpec((ti, tj), lambda j, i: (i, j), **e2_spec_kwargs)

    # Generation-dependent scoped VMEM limit (v7x: 64 MiB physical; v5e/v6e: 128 MiB).
    try:
        phys_vmem = getattr(pltpu.get_tpu_info(), "vmem_capacity_bytes", 64 * 1024 * 1024)
    except Exception:  # pragma: no cover - conservative fallback
        phys_vmem = 64 * 1024 * 1024
    vmem_limit = int(min(100 * 1024 * 1024, (phys_vmem * 3) // 4))

    kernel = functools.partial(_decoder_kernel, ti=ti, e1_resident=e1_resident)
    out2d = pl.pallas_call(
        kernel,
        out_shape=jax.ShapeDtypeStruct((1, d_out), jnp.float32),
        grid_spec=pltpu.PrefetchScalarGridSpec(
            num_scalar_prefetch=0,
            grid=grid,
            in_specs=[
                e1_spec,                                        # embeds1, native (D_in, B)
                pl.BlockSpec((d_in, tj), lambda j, i: (0, j)),  # collapsed metapath matrix
                e2_spec,                                        # embeds2 (dominant HBM stream)
            ],
            out_specs=pl.BlockSpec((1, tj), lambda j, i: (0, j)),   # lane-dense output tile
            scratch_shapes=[pltpu.VMEM((1, tj), jnp.float32)],      # f32 accumulator
        ),
        compiler_params=pltpu.CompilerParams(
            dimension_semantics=("parallel", "arbitrary"),
            vmem_limit_bytes=vmem_limit,
        ),
    )(e1_s, m_s, e2_s)
    return out2d.reshape(d_out)


if __name__ == "__main__":
    # Synthetic deterministic setup mirroring __init__(relations, dims).
    relations = {"protein": [("drug", "targets")], "drug": [("disease", "treats")]}
    dims = {"protein": 32, "drug": 64, "disease": 256}

    key = jax.random.PRNGKey(0)
    mats = {}
    for r1 in relations:
        for r2 in relations[r1]:
            rel = (r1, r2[1], r2[0])
            key, sub = jax.random.split(key)
            mats[rel] = 0.1 * jax.random.normal(
                sub, (dims[rel[0]], dims[rel[2]]), jnp.float32)   # init.normal(std=0.1)

    rels = [("protein", "targets", "drug"), ("drug", "treats", "disease")]
    mat_list = [mats[r] for r in rels]

    # Literal PyTorch broadcasting requires B == D_out of the metapath target type.
    B = dims["disease"]                                            # 256
    key, k1, k2 = jax.random.split(key, 3)
    embeds1 = jax.random.normal(k1, (dims["protein"], B), jnp.float32)   # (32, 256)
    embeds2 = jax.random.normal(k2, (dims["disease"], B), jnp.float32)   # (256, 256)

    # Small tiles + force_pallas so the demo exercises the full 2x2 (parallel x reduction)
    # grid and the VMEM-resident embeds1 path at these tiny shapes.
    dots_bf16 = dot_bilinear_metapath_decode(embeds1, embeds2, mat_list,
                                             lane_tile=128, row_tile=128,
                                             storage_dtype=jnp.bfloat16,
                                             force_pallas=True)
    dots_bf16 = jax.block_until_ready(dots_bf16)

    dots_f32 = dot_bilinear_metapath_decode(embeds1, embeds2, mat_list,
                                            lane_tile=128, row_tile=128,
                                            storage_dtype=jnp.float32,
                                            force_pallas=True)
    dots_f32 = jax.block_until_ready(dots_f32)

    # Pure-JAX reference of the literal PyTorch forward (chained mats, full f32).
    act = embeds1.T
    for m in mat_list:
        act = jnp.dot(act, m, preferred_element_type=jnp.float32,
                      precision=jax.lax.Precision.HIGHEST)
    ref = jnp.sum(act * embeds2, axis=0)

    assert dots_bf16.shape == (B,) and dots_f32.shape == (B,)
    # f32-storage path must match the literal reference tightly (semantics check).
    assert np.allclose(np.asarray(dots_f32), np.asarray(ref), atol=2e-3, rtol=2e-3), (
        "f32 kernel mismatch vs literal reference")
    # default bf16-at-rest fast path (embeds1/embeds2/M rounded to bf16): looser tolerance.
    assert np.allclose(np.asarray(dots_bf16), np.asarray(ref), atol=3e-1, rtol=5e-2), (
        "bf16 kernel mismatch vs literal reference")
    print("KERNEL_OK")
</pallas_src>

<mosaic_0001>
module attributes {stable_mosaic.version = 11 : i64} {
  func.func @_decoder_kernel(%arg0: i32, %arg1: i32, %arg2: memref<32x256xbf16, #tpu.memory_space<vmem>>, %arg3: memref<32x128xbf16, #tpu.memory_space<vmem>>, %arg4: memref<128x128xbf16, #tpu.memory_space<vmem>>, %arg5: memref<1x128xf32, #tpu.memory_space<vmem>>, %arg6: memref<1x128xf32, #tpu.memory_space<vmem>>) attributes {dimension_semantics = [#tpu.dimension_semantics<parallel>, #tpu.dimension_semantics<arbitrary>], iteration_bounds = array<i64: 2, 2>, scalar_prefetch = 0 : i64, scratch_operands = 1 : i64, tpu.core_type = #tpu.core_type<tc>, window_params = [{pipeline_mode = #tpu.pipeline_mode<synchronous>, transform_indices = @transform_0, window_bounds = array<i64: 32, 256>}, {transform_indices = @transform_1, window_bounds = array<i64: 32, 128>}, {transform_indices = @transform_2, window_bounds = array<i64: 128, 128>}, {transform_indices = @transform_3, window_bounds = array<i64: 1, 128>}]} {
    %c0_i32 = arith.constant 0 : i32
    %0 = arith.cmpi eq, %arg1, %c0_i32 : i32
    %1 = arith.extui %0 : i1 to i32
    %c0_i32_0 = arith.constant 0 : i32
    %2 = arith.cmpi ne, %1, %c0_i32_0 : i32
    scf.if %2 {
      %cst_11 = arith.constant 0.000000e+00 : f32
      %20 = vector.broadcast %cst_11 : f32 to vector<1x128xf32>
      %c0_12 = arith.constant 0 : index
      %c0_13 = arith.constant 0 : index
      %21 = vector.load %arg6[%c0_12, %c0_13] : memref<1x128xf32, #tpu.memory_space<vmem>>, vector<1x128xf32>
      tpu.vector_store %arg6[%c0_12, %c0_13], %20 {strides = array<i32>} : memref<1x128xf32, #tpu.memory_space<vmem>>, vector<1x128xf32>,
    } else {
    }
    %c128_i32 = arith.constant 128 : i32
    %3 = arith.muli %arg1, %c128_i32 : i32
    %4 = tpu.assume_multiple %3, 128 : i32
    %c0 = arith.constant 0 : index
    %5 = arith.index_cast %4 : i32 to index
    %6 = vector.load %arg2[%c0, %5] : memref<32x256xbf16, #tpu.memory_space<vmem>>, vector<32x128xbf16>
    %c0_1 = arith.constant 0 : index
    %c0_2 = arith.constant 0 : index
    %7 = vector.load %arg4[%c0_1, %c0_2] : memref<128x128xbf16, #tpu.memory_space<vmem>>, vector<128x128xbf16>
    %cst = arith.constant dense<0.000000e+00> : vector<32x128xf32>
    %8 = tpu.matmul %6, %7, %cst {dimension_numbers = #tpu.dot_dimension_numbers<[1], [0], [0], [1], [0, 0, 1, 1], [], []>} : vector<32x128xbf16>, vector<128x128xbf16>, vector<32x128xf32> -> vector<32x128xf32>
    %c0_3 = arith.constant 0 : index
    %c0_4 = arith.constant 0 : index
    %9 = vector.load %arg6[%c0_3, %c0_4] : memref<1x128xf32, #tpu.memory_space<vmem>>, vector<1x128xf32>
    %c0_5 = arith.constant 0 : index
    %c0_6 = arith.constant 0 : index
    %10 = vector.load %arg3[%c0_5, %c0_6] : memref<32x128xbf16, #tpu.memory_space<vmem>>, vector<32x128xbf16>
    %11 = arith.extf %10 : vector<32x128xbf16> to vector<32x128xf32>
    %12 = arith.mulf %11, %8 : vector<32x128xf32>
    %cst_7 = arith.constant dense<0.000000e+00> : vector<128xf32>
    %13 = vector.multi_reduction <add>, %12, %cst_7 [0] : vector<32x128xf32> to vector<128xf32>
    %14 = vector.shape_cast %13 : vector<128xf32> to vector<1x128xf32>
    %15 = arith.addf %9, %14 : vector<1x128xf32>
    %c0_8 = arith.constant 0 : index
    %c0_9 = arith.constant 0 : index
    %16 = vector.load %arg6[%c0_8, %c0_9] : memref<1x128xf32, #tpu.memory_space<vmem>>, vector<1x128xf32>
    tpu.vector_store %arg6[%c0_8, %c0_9], %15 {strides = array<i32>} : memref<1x128xf32, #tpu.memory_space<vmem>>, vector<1x128xf32>,
    %c1_i32 = arith.constant 1 : i32
    %17 = arith.cmpi eq, %arg1, %c1_i32 : i32
    %18 = arith.extui %17 : i1 to i32
    %c0_i32_10 = arith.constant 0 : i32
    %19 = arith.cmpi ne, %18, %c0_i32_10 : i32
    scf.if %19 {
      %c0_11 = arith.constant 0 : index
      %c0_12 = arith.constant 0 : index
      %20 = vector.load %arg6[%c0_11, %c0_12] : memref<1x128xf32, #tpu.memory_space<vmem>>, vector<1x128xf32>
      %c0_13 = arith.constant 0 : index
      %c0_14 = arith.constant 0 : index
      %21 = vector.load %arg5[%c0_13, %c0_14] : memref<1x128xf32, #tpu.memory_space<vmem>>, vector<1x128xf32>
      tpu.vector_store %arg5[%c0_13, %c0_14], %20 {strides = array<i32>} : memref<1x128xf32, #tpu.memory_space<vmem>>, vector<1x128xf32>,
    } else {
    }
    return
  }
  func.func @transform_0(%arg0: i32, %arg1: i32) -> (i32, i32) {
    %c0_i32 = arith.constant 0 : i32
    %c0_i32_0 = arith.constant 0 : i32
    %c0_i32_1 = arith.constant 0 : i32
    return %c0_i32, %c0_i32_0 : i32, i32
  }
  func.func @transform_1(%arg0: i32, %arg1: i32) -> (i32, i32) {
    %c0_i32 = arith.constant 0 : i32
    %c0_i32_0 = arith.constant 0 : i32
    return %c0_i32, %arg0 : i32, i32
  }
  func.func @transform_2(%arg0: i32, %arg1: i32) -> (i32, i32) {
    %c0_i32 = arith.constant 0 : i32
    return %arg1, %arg0 : i32, i32
  }
  func.func @transform_3(%arg0: i32, %arg1: i32) -> (i32, i32) {
    %c0_i32 = arith.constant 0 : i32
    %c0_i32_0 = arith.constant 0 : i32
    return %c0_i32, %arg0 : i32, i32
  }
}

</mosaic_0001>

<llo_original>
// kernel: tpu_custom_call.1
$region0: #{tpu_custom_call.1}
  #allocation0 [shape = 'u32[]', space=smem, size = 0x4, offset = 0x4, fixed_abs, tag = 'smem constant byte address 0x4 - core index']
  #allocation1 [shape = 'u32[144,128]{1,0:T(1,128)}', space=vmem, size = 0x12000, scoped, tag = 'internal scratch']
  #allocation2 [shape = 'f32[1,128]{1,0:T(1,128)}', space=vmem, size = 0x200, scoped, tag = 'scratch operand']
  %s0 = inlined_call_operand.hbm [shape: bf16[32,256], index: 0, kind: input, shape index: {}]
  %s1 = inlined_call_operand.hbm [shape: bf16[32,256], index: 1, kind: input, shape index: {}]
  %s2 = inlined_call_operand.hbm [shape: bf16[256,256], index: 2, kind: input, shape index: {}]
  %s3 = inlined_call_operand.hbm [shape: f32[1,256], index: 3, kind: output, shape index: {}]
  %s4 = sld [smem:[#allocation0]]
  $region65: #{tpu_custom_call.1} parent=0
    _
  %s6 = ssub.s32 1, %s4
  %s7 = scalar_select 0, %s6, %s4
  $region1: #{tpu_custom_call.1} parent=0
    #allocation3 [shape = 'u8[16384]{0}', space=vmem, size = 0x4000, scoped, tag = 'input window, operand 0, single buffered']
    #allocation4 [shape = 's32[2]{0}', space=sflag, size = 0x8, scoped, tag = 'scoped memory for tpu_custom_call.1']
    #allocation5 [shape = 's32[2]{0}', space=sflag, size = 0x8, scoped, tag = 'scoped memory for tpu_custom_call.1']
    #allocation6 [shape = 'u8[16384]{0}', space=vmem, size = 0x4000, scoped, tag = 'input window, operand 1']
    #allocation7 [shape = 's32[2]{0}', space=sflag, size = 0x8, scoped, tag = 'scoped memory for tpu_custom_call.1']
    #allocation8 [shape = 'u8[65536]{0}', space=vmem, size = 0x10000, scoped, tag = 'input window, operand 2']
    #allocation9 [shape = 'u8[1024]{0}', space=vmem, size = 0x400, scoped, tag = 'output window, operand 0']
    %8 = vsyncpa [#allocation4], 0
    %9 = vsyncpa [#allocation7], 0
    %s10 = scalar_lea.sflag [#allocation7], 1
    %11 = vsyncpa %s10, 0
    %12 = vsyncpa [#allocation5], 0
    %s13 = scalar_lea.sflag [#allocation5], 1
    %14 = vsyncpa %s13, 0
    loop: start=0, step=1, limit=6
    $region2: #{tpu_custom_call.1} parent=1 // loop_pre_header
      _
    $region3: #{tpu_custom_call.1} parent=1 // loop_header
      %s16 = sphi 0, %s20
      %p17 = scmp.ge.s32.totalorder %s16, 6
      %s23 = sphi 0, %s35
      %s24 = sphi 0, %s31
      %s25 = sphi 0, %s23
      %s26 = sphi 0, %s24
      %s27 = sphi 0, %s25
      %s28 = sphi 0, %s26
      %s36 = sphi 0, %s36
      %s38 = sphi 0, %s36
      %s39 = sphi 0, %s38
      %s53 = sphi 0, %s39
      %s59 = sphi 0, %s61
      %s62 = sphi 0, %s59
      %s63 = sphi 0, %s62
      %s79 = sphi 0, %s63
      %s87 = sphi 0, %s89
      %s90 = sphi 0, %s87
      %s91 = sphi 0, %s90
      %s107 = sphi 0, %s91
      %s113 = sphi 0, %s115
      %s116 = sphi 0, %s113
      %s117 = sphi 0, %s116
      %s133 = sphi 0, %s117
    $region4: #{tpu_custom_call.1} parent=1 // loop_header_branch
      %19 = sbr.rel (%p17) target = $region8
    $region5: #{tpu_custom_call.1} parent=1 // loop_body
      %s21 = ssub.s32 %s16, 1
      %s22 = ssub.s32 %s16, 2
      %s29 = sadd.s32 1, %s24
      %p30 = scmp.ge.s32.totalorder %s29, 2
      %s31 = scalar_select %p30, 0, %s29
      %s32 = sadd.s32 1, %s23
      %s33 = scalar_select %p30, %s32, %s23
      %p34 = scmp.ge.s32.totalorder %s33, 2
      %s35 = scalar_select %p34, 0, %s33
      %s37 = sadd.s32 %s36, 1
      %p40 = scmp.eq.s32.totalorder %s16, 3
      %p41 = scmp.ne.s32.totalorder %s36, %s38
      %p42 = scmp.eq.s32.totalorder %s16, 0
      %p43 = por %p41, %p42
      %p44 = scmp.ne.s32.totalorder %s36, %s38
      %p45 = scmp.eq.s32.totalorder %s21, 3
      %p46 = por %p44, %p45
      %p47 = scmp.ne.s32.totalorder %s38, %s39
      %p48 = scmp.eq.s32.totalorder %s21, 0
      %p49 = por %p47, %p48
      %p50 = scmp.ne.s32.totalorder %s38, %s39
      %p51 = scmp.eq.s32.totalorder %s22, 3
      %p52 = por %p50, %p51
      %p54 = scmp.ne.s32.totalorder %s39, %s53
      %p55 = scmp.eq.s32.totalorder %s22, 0
      %p56 = por %p54, %p55
      %s57 = ssub.s32 %s23, %s35
      %p58 = scmp.eq.s32.totalorder %s57, 0
      %s60 = sadd.s32 %s59, 1
      %s61 = scalar_select %p58, %s59, %s60
      %p64 = pneg %p58
      %p65 = scmp.eq.s32.totalorder %s16, 3
      %p66 = por %p64, %p65
      %p67 = scmp.ne.s32.totalorder %s59, %s62
      %p68 = scmp.eq.s32.totalorder %s16, 0
      %p69 = por %p67, %p68
      %p70 = scmp.ne.s32.totalorder %s59, %s62
      %p71 = scmp.eq.s32.totalorder %s21, 3
      %p72 = por %p70, %p71
      %p73 = scmp.ne.s32.totalorder %s62, %s63
      %p74 = scmp.eq.s32.totalorder %s21, 0
      %p75 = por %p73, %p74
      %p76 = scmp.ne.s32.totalorder %s62, %s63
      %p77 = scmp.eq.s32.totalorder %s22, 3
      %p78 = por %p76, %p77
      %p80 = scmp.ne.s32.totalorder %s63, %s79
      %p81 = scmp.eq.s32.totalorder %s22, 0
      %p82 = por %p80, %p81
      %s83 = ssub.s32 %s24, %s31
      %s84 = ssub.s32 %s23, %s35
      %s85 = sor.u32 %s83, %s84
      %p86 = scmp.eq.s32.totalorder %s85, 0
      %s88 = sadd.s32 %s87, 1
      %s89 = scalar_select %p86, %s87, %s88
      %p92 = pneg %p86
      %p93 = scmp.eq.s32.totalorder %s16, 3
      %p94 = por %p92, %p93
      %p95 = scmp.ne.s32.totalorder %s87, %s90
      %p96 = scmp.eq.s32.totalorder %s16, 0
      %p97 = por %p95, %p96
      %p98 = scmp.ne.s32.totalorder %s87, %s90
      %p99 = scmp.eq.s32.totalorder %s21, 3
      %p100 = por %p98, %p99
      %p101 = scmp.ne.s32.totalorder %s90, %s91
      %p102 = scmp.eq.s32.totalorder %s21, 0
      %p103 = por %p101, %p102
      %p104 = scmp.ne.s32.totalorder %s90, %s91
      %p105 = scmp.eq.s32.totalorder %s22, 3
      %p106 = por %p104, %p105
      %p108 = scmp.ne.s32.totalorder %s91, %s107
      %p109 = scmp.eq.s32.totalorder %s22, 0
      %p110 = por %p108, %p109
      %s111 = ssub.s32 %s23, %s35
      %p112 = scmp.eq.s32.totalorder %s111, 0
      %s114 = sadd.s32 %s113, 1
      %s115 = scalar_select %p112, %s113, %s114
      %p118 = pneg %p112
      %p119 = scmp.eq.s32.totalorder %s16, 3
      %p120 = por %p118, %p119
      %p121 = scmp.ne.s32.totalorder %s113, %s116
      %p122 = scmp.eq.s32.totalorder %s16, 0
      %p123 = por %p121, %p122
      %p124 = scmp.ne.s32.totalorder %s113, %s116
      %p125 = scmp.eq.s32.totalorder %s21, 3
      %p126 = por %p124, %p125
      %p127 = scmp.ne.s32.totalorder %s116, %s117
      %p128 = scmp.eq.s32.totalorder %s21, 0
      %p129 = por %p127, %p128
      %p130 = scmp.ne.s32.totalorder %s116, %s117
      %p131 = scmp.eq.s32.totalorder %s22, 3
      %p132 = por %p130, %p131
      %p134 = scmp.ne.s32.totalorder %s117, %s133
      %p135 = scmp.eq.s32.totalorder %s22, 0
      %p136 = por %p134, %p135
      %p137 = scmp.le.s32.totalorder 1, %s16
      %p138 = scmp.lt.s32.totalorder %s16, 5
      %p139 = pnand %p137, %p138
      %p140 = pneg %p139
      // Predicated region
      $region9: #{tpu_custom_call.1} parent=5 // pred_check
        _
      $region10: #{tpu_custom_call.1} parent=5 // pred_check_branch
        %142 = sbr.rel (%p139) target = $region12
      $region11: #{tpu_custom_call.1} parent=5 // pred_region
        %s143 = ssub.s32 %s16, 1
        // Predicated region
        $region13: #{tpu_custom_call.1} parent=11 // pred_check
          %p144 = pneg %p49
        $region14: #{tpu_custom_call.1} parent=11 // pred_check_branch
          %146 = sbr.rel (%p144) target = $region16
        $region15: #{tpu_custom_call.1} parent=11 // pred_region
          %s148 = ssub.s32 512, 512
          %149 = vsyncadd [#allocation4], %s148
          %s150 = sshll.u32 [#allocation3], 4
          %s151 = int_to_ptr.vmem [resolvable:$true] %s150
          %156 = dma.hbm_to_vmem [thread:$0]  %s0, 512, %s151, [#allocation4], 128, 128, 8
        $region16: #{tpu_custom_call.1} parent=11 // pred_fallthru
          _
      $region12: #{tpu_custom_call.1} parent=5 // pred_fallthru
        _
      %p157 = scmp.lt.s32.totalorder %s16, 4
      // Predicated region
      $region17: #{tpu_custom_call.1} parent=5 // pred_check
        %p158 = pneg %p157
      $region18: #{tpu_custom_call.1} parent=5 // pred_check_branch
        %160 = sbr.rel (%p158) target = $region20
      $region19: #{tpu_custom_call.1} parent=5 // pred_region
        // Predicated region
        $region21: #{tpu_custom_call.1} parent=19 // pred_check
          %p161 = pneg %p69
        $region22: #{tpu_custom_call.1} parent=19 // pred_check_branch
          %163 = sbr.rel (%p161) target = $region24
        $region23: #{tpu_custom_call.1} parent=19 // pred_region
          %s164 = sand.u32 %s16, 1
          %s165 = scalar_lea.sflag [#allocation7], %s164
          %s166 = sand.u32 %s59, 1
          %s167 = smul.addr %s166, 16
          %s168 = scalar_lea.vmem [#allocation6], %s167
          %s170 = ssub.s32 256, 256
          %171 = vsyncadd %s165, %s170
          %s172 = smul.addr %s23, 64
          %s173 = scalar_lea.hbm %s1, %s172
          %s174 = sshll.u32 %s168, 4
          %s175 = int_to_ptr.vmem [resolvable:$true] %s174
          %180 = dma.hbm_to_vmem [thread:$0]  %s173, 256, %s175, %s165, 128, 64, 4
        $region24: #{tpu_custom_call.1} parent=19 // pred_fallthru
          _
        // Predicated region
        $region25: #{tpu_custom_call.1} parent=19 // pred_check
          %p181 = pneg %p97
        $region26: #{tpu_custom_call.1} parent=19 // pred_check_branch
          %183 = sbr.rel (%p181) target = $region28
        $region27: #{tpu_custom_call.1} parent=19 // pred_region
          %s184 = sand.u32 %s16, 1
          %s185 = scalar_lea.sflag [#allocation7], %s184
          %s186 = sand.u32 %s87, 1
          %s187 = smul.addr %s186, 64
          %s188 = scalar_lea.vmem [#allocation8], %s187
          %s189 = smul.u32 16, %s24
          %s191 = ssub.s32 1024, 1024
          %192 = vsyncadd %s185, %s191
          %s193 = smul.addr %s189, 2
          %s194 = sadd.s32 %s23, %s193
          %s195 = smul.addr %s194, 64
          %s196 = scalar_lea.hbm %s2, %s195
          %s197 = sshll.u32 %s188, 4
          %s198 = int_to_ptr.vmem [resolvable:$true] %s197
          %203 = dma.hbm_to_vmem [thread:$0]  %s196, 1024, %s198, %s185, 128, 64, 4
        $region28: #{tpu_custom_call.1} parent=19 // pred_fallthru
          _
      $region20: #{tpu_custom_call.1} parent=5 // pred_fallthru
        _
      %p204 = scmp.le.s32.totalorder 1, %s16
      %p205 = scmp.lt.s32.totalorder %s16, 5
      %p206 = pnand %p204, %p205
      %p207 = pneg %p206
      // Predicated region
      $region29: #{tpu_custom_call.1} parent=5 // pred_check
        _
      $region30: #{tpu_custom_call.1} parent=5 // pred_check_branch
        %209 = sbr.rel (%p206) target = $region32
      $region31: #{tpu_custom_call.1} parent=5 // pred_region
        %s210 = ssub.s32 %s16, 1
        // Predicated region
        $region33: #{tpu_custom_call.1} parent=31 // pred_check
          %p211 = pneg %p49
        $region34: #{tpu_custom_call.1} parent=31 // pred_check_branch
          %213 = sbr.rel (%p211) target = $region36
        $region35: #{tpu_custom_call.1} parent=31 // pred_region
          %214 = dma.done [#allocation4], 512
        $region36: #{tpu_custom_call.1} parent=31 // pred_fallthru
          _
        %s215 = sand.u32 %s21, 1
        %s216 = scalar_lea.sflag [#allocation7], %s215
        %s217 = sand.u32 %s62, 1
        %s218 = smul.addr %s217, 16
        %s219 = scalar_lea.vmem [#allocation6], %s218
        // Predicated region
        $region37: #{tpu_custom_call.1} parent=31 // pred_check
          %p220 = pneg %p75
        $region38: #{tpu_custom_call.1} parent=31 // pred_check_branch
          %222 = sbr.rel (%p220) target = $region40
        $region39: #{tpu_custom_call.1} parent=31 // pred_region
          %223 = dma.done %s216, 256
        $region40: #{tpu_custom_call.1} parent=31 // pred_fallthru
          _
        %s224 = sand.u32 %s21, 1
        %s225 = scalar_lea.sflag [#allocation7], %s224
        %s226 = sand.u32 %s90, 1
        %s227 = smul.addr %s226, 64
        %s228 = scalar_lea.vmem [#allocation8], %s227
        // Predicated region
        $region41: #{tpu_custom_call.1} parent=31 // pred_check
          %p229 = pneg %p103
        $region42: #{tpu_custom_call.1} parent=31 // pred_check_branch
          %231 = sbr.rel (%p229) target = $region44
        $region43: #{tpu_custom_call.1} parent=31 // pred_region
          %232 = dma.done %s225, 1024
        $region44: #{tpu_custom_call.1} parent=31 // pred_fallthru
          _
        %p233 = pneg %p49
        %p234 = pneg %p46
        %s235 = sand.u32 %s21, 1
        %s236 = scalar_lea.sflag [#allocation7], %s235
        %s237 = sand.u32 %s62, 1
        %s238 = smul.addr %s237, 16
        %s239 = scalar_lea.vmem [#allocation6], %s238
        %p240 = pneg %p75
        %p241 = pneg %p72
        %s242 = sand.u32 %s21, 1
        %s243 = scalar_lea.sflag [#allocation7], %s242
        %s244 = sand.u32 %s90, 1
        %s245 = smul.addr %s244, 64
        %s246 = scalar_lea.vmem [#allocation8], %s245
        %p247 = pneg %p103
        %p248 = pneg %p100
        %p249 = pneg %p129
        %p250 = pneg %p126
        %s251 = sand.u32 %s116, 1
        %s252 = scalar_lea.sflag [#allocation5], %s251
        %s253 = sand.u32 %s116, 1
        %s254 = scalar_lea.vmem [#allocation9], %s253
        %s255 = smul.u32 16, %s26
        %p257 = scmp.eq.s32.totalorder %s26, 0
        // Predicated region
        $region45: #{tpu_custom_call.1} parent=31 // pred_check
          %p258 = pneg %p257
        $region46: #{tpu_custom_call.1} parent=31 // pred_check_branch
          %260 = sbr.rel (%p258) target = $region48
        $region47: #{tpu_custom_call.1} parent=31 // pred_region
          %261 = vst [vmem:[#allocation2] sm:$0x1] 0.0
        $region48: #{tpu_custom_call.1} parent=31 // pred_fallthru
          _
        %s262 = smul.u32 %s26, 128
        %s263 = sshra.s32 %s262, 7
        %s264 = sand.u32 %s262, 127
        %s265 = smul.addr %s263, 4
        %s266 = scalar_lea.vmem [#allocation3], %s265
        %v267 = vld [vmem:[%s266] sm:$0xf]
        %v268 = vld [vmem:[%s266 + $0x8] sm:$0xf]
        %v269 = vld [vmem:[%s266 + $0x10] sm:$0xf]
        %v270 = vld [vmem:[%s266 + $0x18] sm:$0xf]
        %v271 = vld [vmem:[%s228] sm:$0xf]
        %v272 = vld [vmem:[%s228 + $0x4] sm:$0xf]
        %v273 = vld [vmem:[%s228 + $0x8] sm:$0xf]
        %v274 = vld [vmem:[%s228 + $0xc] sm:$0xf]
        %v275 = vld [vmem:[%s228 + $0x10] sm:$0xf]
        %v276 = vld [vmem:[%s228 + $0x14] sm:$0xf]
        %v277 = vld [vmem:[%s228 + $0x18] sm:$0xf]
        %v278 = vld [vmem:[%s228 + $0x1c] sm:$0xf]
        %v279 = vld [vmem:[%s228 + $0x20] sm:$0xf]
        %v280 = vld [vmem:[%s228 + $0x24] sm:$0xf]
        %v281 = vld [vmem:[%s228 + $0x28] sm:$0xf]
        %v282 = vld [vmem:[%s228 + $0x2c] sm:$0xf]
        %v283 = vld [vmem:[%s228 + $0x30] sm:$0xf]
        %v284 = vld [vmem:[%s228 + $0x34] sm:$0xf]
        %v285 = vld [vmem:[%s228 + $0x38] sm:$0xf]
        %v286 = vld [vmem:[%s228 + $0x3c] sm:$0xf]
        %v291 = vunpack.c.l.b16 %v267
        %v292 = vunpack.c.l.b16 %v268
        %v293 = vunpack.c.l.b16 %v269
        %v294 = vunpack.c.l.b16 %v270
        %v295 = vpack.c.b16 %v292, %v291
        %v296 = vpack.c.b16 %v294, %v293
        %v315 = vunpack.c.l.b16 %v271
        %v316 = vunpack.c.l.b16 %v272
        %v317 = vunpack.c.l.b16 %v273
        %v318 = vunpack.c.l.b16 %v274
        %v319 = vunpack.c.l.b16 %v275
        %v320 = vunpack.c.l.b16 %v276
        %v321 = vunpack.c.l.b16 %v277
        %v322 = vunpack.c.l.b16 %v278
        %v323 = vunpack.c.l.b16 %v279
        %v324 = vunpack.c.l.b16 %v280
        %v325 = vunpack.c.l.b16 %v281
        %v326 = vunpack.c.l.b16 %v282
        %v327 = vunpack.c.l.b16 %v283
        %v328 = vunpack.c.l.b16 %v284
        %v329 = vunpack.c.l.b16 %v285
        %v330 = vunpack.c.l.b16 %v286
        %v331 = vpack.c.b16 %v316, %v315
        %v332 = vpack.c.b16 %v318, %v317
        %v333 = vpack.c.b16 %v320, %v319
        %v334 = vpack.c.b16 %v322, %v321
        %v335 = vpack.c.b16 %v324, %v323
        %v336 = vpack.c.b16 %v326, %v325
        %v337 = vpack.c.b16 %v328, %v327
        %v338 = vpack.c.b16 %v330, %v329
        %347 = vmatprep.subr.bf16.mxu0 0
        %348 = vmatpush1.bf16.msra.mxu0 %v338
        %349 = vmatprep.subr.bf16.mxu0 0
        %350 = vmatpush1.bf16.msra.mxu0 %v337
        %351 = vmatprep.subr.bf16.mxu0 0
        %352 = vmatpush1.bf16.msra.mxu0 %v336
        %353 = vmatprep.subr.bf16.mxu0 0
        %354 = vmatpush1.bf16.msra.mxu0 %v335
        %355 = vmatprep.subr.bf16.mxu0 0
        %356 = vmatpush1.bf16.msra.mxu0 %v334
        %357 = vmatprep.subr.bf16.mxu0 0
        %358 = vmatpush1.bf16.msra.mxu0 %v333
        %359 = vmatprep.subr.bf16.mxu0 0
        %360 = vmatpush1.bf16.msra.mxu0 %v332
        %361 = vmatprep.subr.bf16.mxu0 0
        %362 = vmatpush1.bf16.msra.mxu0 %v331
        %363 = vmatprep.subr.bf16.mxu0 0
        %364 = vmatpush2.bf16.msra.mxu0 0
        %365 = vmatprep.subr.bf16.mxu0 0
        %366 = vmatpush2.bf16.msra.mxu0 0
        %367 = vmatprep.subr.bf16.mxu0 0
        %368 = vmatpush2.bf16.msra.mxu0 0
        %369 = vmatprep.subr.bf16.mxu0 0
        %370 = vmatpush2.bf16.msra.mxu0 0
        %371 = vmatprep.subr.bf16.mxu0 0
        %372 = vmatpush2.bf16.msra.mxu0 0
        %373 = vmatprep.subr.bf16.mxu0 0
        %374 = vmatpush2.bf16.msra.mxu0 0
        %375 = vmatprep.subr.bf16.mxu0 0
        %376 = vmatpush2.bf16.msra.mxu0 0
        %377 = vmatprep.subr.bf16.mxu0 0
        %378 = vmatpush2.bf16.msra.mxu0 0
        %379 = vmatprep.mubr.bf16.mxu0 0
        %380 = vmatmul.mubr.bf16.gmra.mxu0 %v295
        %v381 = vpop.f32.mrf.mxu0
        %v382 = vadd.f32 0.0, %v381
        %v383 = vpop.f32.mrf.mxu0
        %v384 = vpop.f32.mrf.mxu0
        %v385 = vadd.f32 0.0, %v384
        %v386 = vpop.f32.mrf.mxu0
        %387 = vmatprep.mubr.bf16.mxu0 0
        %388 = vmatmul.mubr.bf16.gmra.mxu0 %v296
        %v389 = vpop.f32.mrf.mxu0
        %v390 = vadd.f32 0.0, %v389
        %v391 = vpop.f32.mrf.mxu0
        %v392 = vpop.f32.mrf.mxu0
        %v393 = vadd.f32 0.0, %v392
        %v394 = vpop.f32.mrf.mxu0
        %395 = vdwg.mxu0
        %v396 = vld [vmem:[#allocation2] sm:$0x1]
        %v397 = vld [vmem:[%s219] sm:$0xf]
        %v398 = vld [vmem:[%s219 + $0x4] sm:$0xf]
        %v399 = vld [vmem:[%s219 + $0x8] sm:$0xf]
        %v400 = vld [vmem:[%s219 + $0xc] sm:$0xf]
        %v401 = vunpack.c.l.bf16 %v397
        %v402 = vunpack.c.l.bf16 %v398
        %v403 = vunpack.c.l.bf16 %v399
        %v404 = vunpack.c.l.bf16 %v400
        %v405 = vmul.f32 %v401, %v382
        %v406 = vmul.f32 %v402, %v385
        %v407 = vmul.f32 %v403, %v390
        %v408 = vmul.f32 %v404, %v393
        %v409 = vadd.f32 %v405, %v406
        %v410 = vadd.f32 %v409, %v407
        %v411 = vadd.f32 %v410, %v408
        %v412 = vrot.slane %v411, 4
        %v413 = vadd.f32 %v411, %v412
        %v414 = vrot.slane %v413, 2
        %v415 = vadd.f32 %v413, %v414
        %v416 = vrot.slane %v415, 1
        %v417 = vadd.f32 %v415, %v416
        %v418 = vadd.f32 %v396, %v417
        %419 = vst [vmem:[#allocation2] sm:$0x1] %v418
        %p420 = scmp.eq.s32.totalorder %s26, 1
        // Predicated region
        $region49: #{tpu_custom_call.1} parent=31 // pred_check
          %p421 = pneg %p420
        $region50: #{tpu_custom_call.1} parent=31 // pred_check_branch
          %423 = sbr.rel (%p421) target = $region52
        $region51: #{tpu_custom_call.1} parent=31 // pred_region
          %v424 = vld [vmem:[#allocation2] sm:$0x1]
          %425 = vst [vmem:[%s254] sm:$0x1] %v424
        $region52: #{tpu_custom_call.1} parent=31 // pred_fallthru
          _
        %s426 = sand.u32 %s116, 1
        %s427 = scalar_lea.sflag [#allocation5], %s426
        %s428 = sand.u32 %s116, 1
        %s429 = scalar_lea.vmem [#allocation9], %s428
        // Predicated region
        $region53: #{tpu_custom_call.1} parent=31 // pred_check
          %p430 = pneg %p126
        $region54: #{tpu_custom_call.1} parent=31 // pred_check_branch
          %432 = sbr.rel (%p430) target = $region56
        $region55: #{tpu_custom_call.1} parent=31 // pred_region
          %s434 = ssub.s32 16, 16
          %435 = vsyncadd %s427, %s434
          %s436 = smul.addr %s25, 16
          %s437 = scalar_lea.hbm %s3, %s436
          %s439 = sshll.u32 %s429, 4
          %s440 = int_to_ptr.vmem [resolvable:$true] %s439
          %442 = dma.vmem_to_hbm [thread:$0]  %s440, 16, %s437, %s427
        $region56: #{tpu_custom_call.1} parent=31 // pred_fallthru
          _
      $region32: #{tpu_custom_call.1} parent=5 // pred_fallthru
        _
      %p443 = scmp.le.s32.totalorder 2, %s16
      // Predicated region
      $region57: #{tpu_custom_call.1} parent=5 // pred_check
        %p444 = pneg %p443
      $region58: #{tpu_custom_call.1} parent=5 // pred_check_branch
        %446 = sbr.rel (%p444) target = $region60
      $region59: #{tpu_custom_call.1} parent=5 // pred_region
        %s447 = ssub.s32 %s16, 2
        // Predicated region
        $region61: #{tpu_custom_call.1} parent=59 // pred_check
          %p448 = pneg %p132
        $region62: #{tpu_custom_call.1} parent=59 // pred_check_branch
          %450 = sbr.rel (%p448) target = $region64
        $region63: #{tpu_custom_call.1} parent=59 // pred_region
          %s451 = sand.u32 %s117, 1
          %s452 = scalar_lea.sflag [#allocation5], %s451
          %s453 = sand.u32 %s117, 1
          %s454 = scalar_lea.vmem [#allocation9], %s453
          %455 = dma.done %s452, 16
        $region64: #{tpu_custom_call.1} parent=59 // pred_fallthru
          _
      $region60: #{tpu_custom_call.1} parent=5 // pred_fallthru
        _
    $region6: #{tpu_custom_call.1} parent=1 // loop_footer
      %s20 = sadd.s32 1, %s16
    $region7: #{tpu_custom_call.1} parent=1 // loop_footer_branch
      %15 = sbr.rel target = $region3
    $region8: #{tpu_custom_call.1} parent=1 // loop_exit
      _
    %456 = vsyncpa [#allocation4], 1
    %s457 = scalar_lea.sflag [#allocation4], 1
    %458 = vsyncpa %s457, 1
    %459 = vsyncpa [#allocation7], 1
    %s460 = scalar_lea.sflag [#allocation7], 1
    %461 = vsyncpa %s460, 1
    %462 = vsyncpa [#allocation5], 1
    %s463 = scalar_lea.sflag [#allocation5], 1
    %464 = vsyncpa %s463, 1

</llo_original>
